<compile_context>
chip_gen: v7x
topology: tpu7x:2x2x1
jax: 0.10.0
libtpu: 0.0.40
codegen_flags: <defaults>
</compile_context>

<pallas_src>
import jax
import jax.numpy as jnp
from jax.experimental import pallas as pl
from jax.experimental.pallas import tpu as pltpu


def _discriminator_kernel(x_ref, w1_ref, b1_ref, w2_ref, b2_ref, w3_ref, b3_ref,
                          o_ref):
    x = x_ref[...]                                                  # (TB, D_in)
    # Layer 1: Linear + Tanh (MXU + EUP)
    h1 = jnp.dot(x, w1_ref[...], preferred_element_type=jnp.float32)
    h1 = jnp.tanh(h1 + b1_ref[...])                                 # (TB, 64)
    # Layer 2: Linear + Tanh (MXU + EUP)
    h2 = jnp.dot(h1, w2_ref[...], preferred_element_type=jnp.float32)
    h2 = jnp.tanh(h2 + b2_ref[...])                                 # (TB, 64)
    # Layer 3: Linear(64 -> 1) as VPU multiply + lane reduction (keepdims so
    # everything stays 2-D), then Sigmoid.
    logits = jnp.sum(h2 * w3_ref[...], axis=-1, keepdims=True)      # (TB, 1)
    logits = logits + b3_ref[...]
    o_ref[...] = jax.nn.sigmoid(logits).astype(o_ref.dtype)


def _round_up(x: int, m: int) -> int:
    return ((x + m - 1) // m) * m


def discriminator_forward(state_action, params, *, tile_b=512):
    """state_action: [B, state_dim + num_actions] float32 -> [B, 1] float32."""
    w1, b1, w2, b2, w3, b3 = params
    B, d_in = state_action.shape
    h = w1.shape[1]          # 64

    # Pick the batch tile: large tiles amortize the ~0.35us/step grid overhead
    # and fill the MXU's M dimension; tile_b stays a multiple of 128 so the
    # x block and output block are cleanly aligned.
    b_aligned = _round_up(B, 128)
    tile_b = max(128, min(_round_up(tile_b, 128), b_aligned))
    # Keep >=2 parallel grid steps when the batch allows it (v7x megacore).
    if tile_b >= b_aligned and b_aligned >= 256:
        tile_b = _round_up(b_aligned // 2, 128)

    num_tiles = pl.cdiv(B, tile_b)
    b_pad = num_tiles * tile_b
    x = state_action
    if b_pad != B:
        x = jnp.pad(x, ((0, b_pad - B), (0, 0)))   # zero-padded tail, trimmed below

    flops = 2 * b_pad * (d_in * h + h * h + h)
    transcendentals = b_pad * (2 * h + 1)                    # tanh x128 + sigmoid
    bytes_accessed = 4 * (b_pad * d_in + b_pad
                          + d_in * h + h + h * h + h + h + 1)

    out = pl.pallas_call(
        _discriminator_kernel,
        out_shape=jax.ShapeDtypeStruct((b_pad, 1), jnp.float32),
        grid_spec=pltpu.PrefetchScalarGridSpec(
            num_scalar_prefetch=0,
            grid=(num_tiles,),
            in_specs=[
                # activations: tiled over batch
                pl.BlockSpec((tile_b, d_in), lambda i: (i, 0)),
                # weights / biases: full blocks, grid-invariant index_map
                # (stay resident in VMEM across all batch tiles)
                pl.BlockSpec((d_in, h), lambda i: (0, 0)),
                pl.BlockSpec((1, h), lambda i: (0, 0)),
                pl.BlockSpec((h, h), lambda i: (0, 0)),
                pl.BlockSpec((1, h), lambda i: (0, 0)),
                pl.BlockSpec((1, h), lambda i: (0, 0)),    # w3 row ([out, in])
                pl.BlockSpec((1, 1), lambda i: (0, 0)),    # b3
            ],
            out_specs=pl.BlockSpec((tile_b, 1), lambda i: (i, 0)),
        ),
        compiler_params=pltpu.CompilerParams(
            dimension_semantics=("parallel",)),
        cost_estimate=pl.CostEstimate(
            flops=flops,
            transcendentals=transcendentals,
            bytes_accessed=bytes_accessed),
    )(x, w1, b1, w2, b2, w3, b3)

    return out[:B]


def init_params(key, state_dim, num_actions, hidden=64):
    """Deterministic synthetic parameters (PyTorch Linear semantics)."""
    d_in = state_dim + num_actions
    ks = jax.random.split(key, 6)
    # w1/w2 pre-transposed to [in, out] for x @ W; w3/b3 keep PyTorch [out, in].
    w1 = jax.random.uniform(ks[0], (d_in, hidden), jnp.float32, -0.1, 0.1)
    b1 = jax.random.uniform(ks[1], (1, hidden), jnp.float32, -0.1, 0.1)
    w2 = jax.random.uniform(ks[2], (hidden, hidden), jnp.float32, -0.1, 0.1)
    b2 = jax.random.uniform(ks[3], (1, hidden), jnp.float32, -0.1, 0.1)
    w3 = jax.random.uniform(ks[4], (1, hidden), jnp.float32, -0.1, 0.1)
    b3 = jax.random.uniform(ks[5], (1, 1), jnp.float32, -0.1, 0.1)
    return (w1, b1, w2, b2, w3, b3)


def reference_forward(state_action, params):
    w1, b1, w2, b2, w3, b3 = params
    h1 = jnp.tanh(state_action @ w1 + b1)
    h2 = jnp.tanh(h1 @ w2 + b2)
    return jax.nn.sigmoid(h2 @ w3.T + b3)


if __name__ == "__main__":
    key = jax.random.PRNGKey(0)
    k_params, k_x = jax.random.split(key)

    # Small, forward-consistent shapes: state_dim=12, num_actions=4, batch=16.
    state_dim, num_actions, batch = 12, 4, 16
    params = init_params(k_params, state_dim, num_actions)
    state_action = jax.random.normal(
        k_x, (batch, state_dim + num_actions), jnp.float32)

    out = discriminator_forward(state_action, params)
    out = jax.block_until_ready(out)

    ref = reference_forward(state_action, params)
    assert out.shape == (batch, 1)
    assert jnp.allclose(out, ref, atol=1e-4, rtol=1e-4), "mismatch vs reference"

    print("KERNEL_OK")
</pallas_src>

<mosaic_0001>
module attributes {stable_mosaic.version = 11 : i64} {
  func.func @_discriminator_kernel(%arg0: i32, %arg1: memref<128x16xf32, #tpu.memory_space<vmem>>, %arg2: memref<16x64xf32, #tpu.memory_space<vmem>>, %arg3: memref<1x64xf32, #tpu.memory_space<vmem>>, %arg4: memref<64x64xf32, #tpu.memory_space<vmem>>, %arg5: memref<1x64xf32, #tpu.memory_space<vmem>>, %arg6: memref<1x64xf32, #tpu.memory_space<vmem>>, %arg7: memref<1x1xf32, #tpu.memory_space<vmem>>, %arg8: memref<128x1xf32, #tpu.memory_space<vmem>>) attributes {dimension_semantics = [#tpu.dimension_semantics<parallel>], iteration_bounds = array<i64: 1>, scalar_prefetch = 0 : i64, scratch_operands = 0 : i64, tpu.core_type = #tpu.core_type<tc>, window_params = [{transform_indices = @transform_0, window_bounds = array<i64: 128, 16>}, {pipeline_mode = #tpu.pipeline_mode<synchronous>, transform_indices = @transform_1, window_bounds = array<i64: 16, 64>}, {pipeline_mode = #tpu.pipeline_mode<synchronous>, transform_indices = @transform_2, window_bounds = array<i64: 1, 64>}, {pipeline_mode = #tpu.pipeline_mode<synchronous>, transform_indices = @transform_3, window_bounds = array<i64: 64, 64>}, {pipeline_mode = #tpu.pipeline_mode<synchronous>, transform_indices = @transform_4, window_bounds = array<i64: 1, 64>}, {pipeline_mode = #tpu.pipeline_mode<synchronous>, transform_indices = @transform_5, window_bounds = array<i64: 1, 64>}, {pipeline_mode = #tpu.pipeline_mode<synchronous>, transform_indices = @transform_6, window_bounds = array<i64: 1, 1>}, {transform_indices = @transform_7, window_bounds = array<i64: 128, 1>}]} {
    %c0 = arith.constant 0 : index
    %c0_0 = arith.constant 0 : index
    %0 = vector.load %arg1[%c0, %c0_0] : memref<128x16xf32, #tpu.memory_space<vmem>>, vector<128x16xf32>
    %c0_1 = arith.constant 0 : index
    %c0_2 = arith.constant 0 : index
    %1 = vector.load %arg2[%c0_1, %c0_2] : memref<16x64xf32, #tpu.memory_space<vmem>>, vector<16x64xf32>
    %cst = arith.constant dense<0.000000e+00> : vector<128x64xf32>
    %2 = tpu.matmul %0, %1, %cst {dimension_numbers = #tpu.dot_dimension_numbers<[1], [0], [0], [1], [0, 0, 1, 1], [], []>} : vector<128x16xf32>, vector<16x64xf32>, vector<128x64xf32> -> vector<128x64xf32>
    %c0_3 = arith.constant 0 : index
    %c0_4 = arith.constant 0 : index
    %3 = vector.load %arg3[%c0_3, %c0_4] : memref<1x64xf32, #tpu.memory_space<vmem>>, vector<1x64xf32>
    %4 = vector.broadcast %3 : vector<1x64xf32> to vector<128x64xf32>
    %5 = arith.addf %2, %4 : vector<128x64xf32>
    %6 = math.tanh %5 : vector<128x64xf32>
    %c0_5 = arith.constant 0 : index
    %c0_6 = arith.constant 0 : index
    %7 = vector.load %arg4[%c0_5, %c0_6] : memref<64x64xf32, #tpu.memory_space<vmem>>, vector<64x64xf32>
    %cst_7 = arith.constant dense<0.000000e+00> : vector<128x64xf32>
    %8 = tpu.matmul %6, %7, %cst_7 {dimension_numbers = #tpu.dot_dimension_numbers<[1], [0], [0], [1], [0, 0, 1, 1], [], []>} : vector<128x64xf32>, vector<64x64xf32>, vector<128x64xf32> -> vector<128x64xf32>
    %c0_8 = arith.constant 0 : index
    %c0_9 = arith.constant 0 : index
    %9 = vector.load %arg5[%c0_8, %c0_9] : memref<1x64xf32, #tpu.memory_space<vmem>>, vector<1x64xf32>
    %10 = vector.broadcast %9 : vector<1x64xf32> to vector<128x64xf32>
    %11 = arith.addf %8, %10 : vector<128x64xf32>
    %12 = math.tanh %11 : vector<128x64xf32>
    %c0_10 = arith.constant 0 : index
    %c0_11 = arith.constant 0 : index
    %13 = vector.load %arg6[%c0_10, %c0_11] : memref<1x64xf32, #tpu.memory_space<vmem>>, vector<1x64xf32>
    %14 = vector.broadcast %13 : vector<1x64xf32> to vector<128x64xf32>
    %15 = arith.mulf %12, %14 : vector<128x64xf32>
    %cst_12 = arith.constant dense<0.000000e+00> : vector<128xf32>
    %16 = vector.multi_reduction <add>, %15, %cst_12 [1] : vector<128x64xf32> to vector<128xf32>
    %17 = vector.shape_cast %16 : vector<128xf32> to vector<128x1xf32>
    %c0_13 = arith.constant 0 : index
    %c0_14 = arith.constant 0 : index
    %18 = vector.load %arg7[%c0_13, %c0_14] : memref<1x1xf32, #tpu.memory_space<vmem>>, vector<1x1xf32>
    %19 = vector.broadcast %18 : vector<1x1xf32> to vector<128x1xf32>
    %20 = arith.addf %17, %19 : vector<128x1xf32>
    %21 = arith.negf %20 : vector<128x1xf32>
    %22 = math.exp %21 : vector<128x1xf32>
    %cst_15 = arith.constant 1.000000e+00 : f32
    %23 = vector.broadcast %cst_15 : f32 to vector<128x1xf32>
    %24 = arith.addf %23, %22 : vector<128x1xf32>
    %25 = arith.divf %23, %24 : vector<128x1xf32>
    %c0_16 = arith.constant 0 : index
    %c0_17 = arith.constant 0 : index
    %26 = vector.load %arg8[%c0_16, %c0_17] : memref<128x1xf32, #tpu.memory_space<vmem>>, vector<128x1xf32>
    tpu.vector_store %arg8[%c0_16, %c0_17], %25 {strides = array<i32>} : memref<128x1xf32, #tpu.memory_space<vmem>>, vector<128x1xf32>,
    return
  }
  func.func @transform_0(%arg0: i32) -> (i32, i32) {
    %c0_i32 = arith.constant 0 : i32
    %c0_i32_0 = arith.constant 0 : i32
    return %arg0, %c0_i32 : i32, i32
  }
  func.func @transform_1(%arg0: i32) -> (i32, i32) {
    %c0_i32 = arith.constant 0 : i32
    %c0_i32_0 = arith.constant 0 : i32
    %c0_i32_1 = arith.constant 0 : i32
    return %c0_i32, %c0_i32_0 : i32, i32
  }
  func.func @transform_2(%arg0: i32) -> (i32, i32) {
    %c0_i32 = arith.constant 0 : i32
    %c0_i32_0 = arith.constant 0 : i32
    %c0_i32_1 = arith.constant 0 : i32
    return %c0_i32, %c0_i32_0 : i32, i32
  }
  func.func @transform_3(%arg0: i32) -> (i32, i32) {
    %c0_i32 = arith.constant 0 : i32
    %c0_i32_0 = arith.constant 0 : i32
    %c0_i32_1 = arith.constant 0 : i32
    return %c0_i32, %c0_i32_0 : i32, i32
  }
  func.func @transform_4(%arg0: i32) -> (i32, i32) {
    %c0_i32 = arith.constant 0 : i32
    %c0_i32_0 = arith.constant 0 : i32
    %c0_i32_1 = arith.constant 0 : i32
    return %c0_i32, %c0_i32_0 : i32, i32
  }
  func.func @transform_5(%arg0: i32) -> (i32, i32) {
    %c0_i32 = arith.constant 0 : i32
    %c0_i32_0 = arith.constant 0 : i32
    %c0_i32_1 = arith.constant 0 : i32
    return %c0_i32, %c0_i32_0 : i32, i32
  }
  func.func @transform_6(%arg0: i32) -> (i32, i32) {
    %c0_i32 = arith.constant 0 : i32
    %c0_i32_0 = arith.constant 0 : i32
    %c0_i32_1 = arith.constant 0 : i32
    return %c0_i32, %c0_i32_0 : i32, i32
  }
  func.func @transform_7(%arg0: i32) -> (i32, i32) {
    %c0_i32 = arith.constant 0 : i32
    %c0_i32_0 = arith.constant 0 : i32
    return %arg0, %c0_i32 : i32, i32
  }
}

</mosaic_0001>

<llo_original>
// kernel: tpu_custom_call.1
$region0: #{tpu_custom_call.1}
  #allocation0 [shape = 'u32[]', space=smem, size = 0x4, offset = 0x4, fixed_abs, tag = 'smem constant byte address 0x4 - core index']
  #allocation1 [shape = 'u32[144,128]{1,0:T(1,128)}', space=vmem, size = 0x12000, scoped, tag = 'internal scratch']
  #allocation2 [shape = 'f32[1,1]{1,0:T(1,128)S(1)}', space=vmem, size = 0x200, scoped, tag = 'scoped memory for tpu_custom_call.1']
  %s0 = inlined_call_operand.vmem [shape: f32[128,16], index: 0, kind: input, shape index: {}]
  %s1 = inlined_call_operand.vmem [shape: f32[16,64], index: 1, kind: input, shape index: {}]
  %s2 = inlined_call_operand.vmem [shape: f32[1,64], index: 2, kind: input, shape index: {}]
  %s3 = inlined_call_operand.vmem [shape: f32[64,64], index: 3, kind: input, shape index: {}]
  %s4 = inlined_call_operand.vmem [shape: f32[1,64], index: 4, kind: input, shape index: {}]
  %s5 = inlined_call_operand.vmem [shape: f32[1,64], index: 5, kind: input, shape index: {}]
  %s6 = inlined_call_operand.<no memory space> [shape: f32[1,1], index: 6, kind: input, shape index: {}]
  %s7 = inlined_call_operand.vmem [shape: f32[128,1], index: 7, kind: output, shape index: {}]
  %s8 = sld [smem:[#allocation0]]
  $region38: #{tpu_custom_call.1} parent=0
    _
  %s10 = ssub.s32 1, %s8
  %s11 = scalar_select 0, %s10, %s8
  %v12 = vstv %s6
  %13 = vst [vmem:[#allocation2] sm:$0x1] %v12
  // Predicated region
  $region2: #{tpu_custom_call.1} parent=0 // pred_check
    _
  $region3: #{tpu_custom_call.1} parent=0 // pred_check_branch
    %15 = sbr.rel (0) target = $region5
  $region4: #{tpu_custom_call.1} parent=0 // pred_region
    _
  $region5: #{tpu_custom_call.1} parent=0 // pred_fallthru
    _
  // Predicated region
  $region6: #{tpu_custom_call.1} parent=0 // pred_check
    _
  $region7: #{tpu_custom_call.1} parent=0 // pred_check_branch
    %17 = sbr.rel (0) target = $region9
  $region8: #{tpu_custom_call.1} parent=0 // pred_region
    _
  $region9: #{tpu_custom_call.1} parent=0 // pred_fallthru
    _
  // Predicated region
  $region10: #{tpu_custom_call.1} parent=0 // pred_check
    _
  $region11: #{tpu_custom_call.1} parent=0 // pred_check_branch
    %19 = sbr.rel (0) target = $region13
  $region12: #{tpu_custom_call.1} parent=0 // pred_region
    _
  $region13: #{tpu_custom_call.1} parent=0 // pred_fallthru
    _
  // Predicated region
  $region14: #{tpu_custom_call.1} parent=0 // pred_check
    _
  $region15: #{tpu_custom_call.1} parent=0 // pred_check_branch
    %21 = sbr.rel (0) target = $region17
  $region16: #{tpu_custom_call.1} parent=0 // pred_region
    _
  $region17: #{tpu_custom_call.1} parent=0 // pred_fallthru
    _
  // Predicated region
  $region18: #{tpu_custom_call.1} parent=0 // pred_check
    _
  $region19: #{tpu_custom_call.1} parent=0 // pred_check_branch
    %23 = sbr.rel (0) target = $region21
  $region20: #{tpu_custom_call.1} parent=0 // pred_region
    _
  $region21: #{tpu_custom_call.1} parent=0 // pred_fallthru
    _
  // Predicated region
  $region22: #{tpu_custom_call.1} parent=0 // pred_check
    _
  $region23: #{tpu_custom_call.1} parent=0 // pred_check_branch
    %25 = sbr.rel (0) target = $region25
  $region24: #{tpu_custom_call.1} parent=0 // pred_region
    _
  $region25: #{tpu_custom_call.1} parent=0 // pred_fallthru
    _
  // Predicated region
  $region26: #{tpu_custom_call.1} parent=0 // pred_check
    _
  $region27: #{tpu_custom_call.1} parent=0 // pred_check_branch
    %27 = sbr.rel (0) target = $region29
  $region28: #{tpu_custom_call.1} parent=0 // pred_region
    _
  $region29: #{tpu_custom_call.1} parent=0 // pred_fallthru
    _
  %v28 = vld [vmem:[%s0] sm:$0xff]
  %v29 = vld [vmem:[%s0 + $0x8] sm:$0xff]
  %v30 = vld [vmem:[%s0 + $0x10] sm:$0xff]
  %v31 = vld [vmem:[%s0 + $0x18] sm:$0xff]
  %v32 = vld [vmem:[%s0 + $0x20] sm:$0xff]
  %v33 = vld [vmem:[%s0 + $0x28] sm:$0xff]
  %v34 = vld [vmem:[%s0 + $0x30] sm:$0xff]
  %v35 = vld [vmem:[%s0 + $0x38] sm:$0xff]
  %v36 = vld [vmem:[%s0 + $0x40] sm:$0xff]
  %v37 = vld [vmem:[%s0 + $0x48] sm:$0xff]
  %v38 = vld [vmem:[%s0 + $0x50] sm:$0xff]
  %v39 = vld [vmem:[%s0 + $0x58] sm:$0xff]
  %v40 = vld [vmem:[%s0 + $0x60] sm:$0xff]
  %v41 = vld [vmem:[%s0 + $0x68] sm:$0xff]
  %v42 = vld [vmem:[%s0 + $0x70] sm:$0xff]
  %v43 = vld [vmem:[%s0 + $0x78] sm:$0xff]
  %v44 = vld [vmem:[%s1] sm:$0xff]
  %v45 = vld [vmem:[%s1 + $0x8] sm:$0xff]
  %v46 = vld [vmem:[%s2] sm:$0x1]
  %v48 = vlaneseq
  %v49 = vshrl.u32 %v48, 7
  %v50 = vsub.s32 0, %v49
  %v51 = vrot.slane %v46, %v50
  %vm53 = vcmask 130048
  %v55 = vsel %vm53, %v28, 0
  %v58 = vsel %vm53, %v29, 0
  %v61 = vsel %vm53, %v30, 0
  %v64 = vsel %vm53, %v31, 0
  %v67 = vsel %vm53, %v32, 0
  %v70 = vsel %vm53, %v33, 0
  %v73 = vsel %vm53, %v34, 0
  %v76 = vsel %vm53, %v35, 0
  %v79 = vsel %vm53, %v36, 0
  %v82 = vsel %vm53, %v37, 0
  %v85 = vsel %vm53, %v38, 0
  %v88 = vsel %vm53, %v39, 0
  %v91 = vsel %vm53, %v40, 0
  %v94 = vsel %vm53, %v41, 0
  %v97 = vsel %vm53, %v42, 0
  %v100 = vsel %vm53, %v43, 0
  %102 = vmatprep.subr.mxu0 0.0
  %103 = vmatpush1.msra.mxu0 %v44
  %104 = vmatprep.subr.mxu0 0.0
  %105 = vmatpush1.msra.mxu0 %v45
  %106 = vmatprep.subr.mxu0 0.0
  %107 = vmatpush1.msra.mxu0 0.0
  %108 = vmatprep.subr.mxu0 0.0
  %109 = vmatpush1.msra.mxu0 0.0
  %110 = vmatprep.subr.mxu0 0.0
  %111 = vmatpush1.msra.mxu0 0.0
  %112 = vmatprep.subr.mxu0 0.0
  %113 = vmatpush1.msra.mxu0 0.0
  %114 = vmatprep.subr.mxu0 0.0
  %115 = vmatpush1.msra.mxu0 0.0
  %116 = vmatprep.subr.mxu0 0.0
  %117 = vmatpush1.msra.mxu0 0.0
  %118 = vmatprep.subr.mxu0 0.0
  %119 = vmatpush1.msra.mxu0 0.0
  %120 = vmatprep.subr.mxu0 0.0
  %121 = vmatpush1.msra.mxu0 0.0
  %122 = vmatprep.subr.mxu0 0.0
  %123 = vmatpush1.msra.mxu0 0.0
  %124 = vmatprep.subr.mxu0 0.0
  %125 = vmatpush1.msra.mxu0 0.0
  %126 = vmatprep.subr.mxu0 0.0
  %127 = vmatpush1.msra.mxu0 0.0
  %128 = vmatprep.subr.mxu0 0.0
  %129 = vmatpush1.msra.mxu0 0.0
  %130 = vmatprep.subr.mxu0 0.0
  %131 = vmatpush1.msra.mxu0 0.0
  %132 = vmatprep.subr.mxu0 0.0
  %133 = vmatpush1.msra.mxu0 0.0
  %134 = vmatprep.subr.mxu0 0.0
  %135 = vmatpush1.msra.mxu0 0.0
  %136 = vmatprep.subr.mxu0 0.0
  %137 = vmatpush1.msra.mxu0 0.0
  %138 = vmatprep.subr.mxu0 0.0
  %139 = vmatpush1.msra.mxu0 0.0
  %140 = vmatprep.subr.mxu0 0.0
  %141 = vmatpush1.msra.mxu0 0.0
  %142 = vmatprep.subr.mxu0 0.0
  %143 = vmatpush1.msra.mxu0 0.0
  %144 = vmatprep.subr.mxu0 0.0
  %145 = vmatpush1.msra.mxu0 0.0
  %146 = vmatprep.subr.mxu0 0.0
  %147 = vmatpush1.msra.mxu0 0.0
  %148 = vmatprep.subr.mxu0 0.0
  %149 = vmatpush1.msra.mxu0 0.0
  %150 = vmatprep.subr.mxu0 0.0
  %151 = vmatpush1.msra.mxu0 0.0
  %152 = vmatprep.subr.mxu0 0.0
  %153 = vmatpush1.msra.mxu0 0.0
  %154 = vmatprep.subr.mxu0 0.0
  %155 = vmatpush1.msra.mxu0 0.0
  %156 = vmatprep.subr.mxu0 0.0
  %157 = vmatpush1.msra.mxu0 0.0
  %158 = vmatprep.subr.mxu0 0.0
  %159 = vmatpush1.msra.mxu0 0.0
  %160 = vmatprep.subr.mxu0 0.0
  %161 = vmatpush1.msra.mxu0 0.0
  %162 = vmatprep.subr.mxu0 0.0
  %163 = vmatpush1.msra.mxu0 0.0
  %164 = vmatprep.subr.mxu0 0.0
  %165 = vmatpush1.msra.mxu0 0.0
  %166 = vmatprep.mubr.f32.mxu0 0.0
  %167 = vmatmul.mubr.f32.gmra.mrb[0].mxu0 %v55
  %v168 = vpop.f32.mrb[0].mxu0
  %v169 = vadd.f32 %v51, %v168
  %v170 = vpop.f32.mrb[0].mxu0
  %171 = vmatprep.mubr.f32.mxu0 0.0
  %172 = vmatmul.mubr.f32.gmra.mrb[0].mxu0 %v58
  %v173 = vpop.f32.mrb[0].mxu0
  %v174 = vadd.f32 %v51, %v173
  %v175 = vpop.f32.mrb[0].mxu0
  %176 = vmatprep.mubr.f32.mxu0 0.0
  %177 = vmatmul.mubr.f32.gmra.mrb[0].mxu0 %v61
  %v178 = vpop.f32.mrb[0].mxu0
  %v179 = vadd.f32 %v51, %v178
  %v180 = vpop.f32.mrb[0].mxu0
  %181 = vmatprep.mubr.f32.mxu0 0.0
  %182 = vmatmul.mubr.f32.gmra.mrb[0].mxu0 %v64
  %v183 = vpop.f32.mrb[0].mxu0
  %v184 = vadd.f32 %v51, %v183
  %v185 = vpop.f32.mrb[0].mxu0
  %186 = vmatprep.mubr.f32.mxu0 0.0
  %187 = vmatmul.mubr.f32.gmra.mrb[0].mxu0 %v67
  %v188 = vpop.f32.mrb[0].mxu0
  %v189 = vadd.f32 %v51, %v188
  %v190 = vpop.f32.mrb[0].mxu0
  %191 = vmatprep.mubr.f32.mxu0 0.0
  %192 = vmatmul.mubr.f32.gmra.mrb[0].mxu0 %v70
  %v193 = vpop.f32.mrb[0].mxu0
  %v194 = vadd.f32 %v51, %v193
  %v195 = vpop.f32.mrb[0].mxu0
  %196 = vmatprep.mubr.f32.mxu0 0.0
  %197 = vmatmul.mubr.f32.gmra.mrb[0].mxu0 %v73
  %v198 = vpop.f32.mrb[0].mxu0
  %v199 = vadd.f32 %v51, %v198
  %v200 = vpop.f32.mrb[0].mxu0
  %201 = vmatprep.mubr.f32.mxu0 0.0
  %202 = vmatmul.mubr.f32.gmra.mrb[0].mxu0 %v76
  %v203 = vpop.f32.mrb[0].mxu0
  %v204 = vadd.f32 %v51, %v203
  %v205 = vpop.f32.mrb[0].mxu0
  %206 = vmatprep.mubr.f32.mxu0 0.0
  %207 = vmatmul.mubr.f32.gmra.mrb[0].mxu0 %v79
  %v208 = vpop.f32.mrb[0].mxu0
  %v209 = vadd.f32 %v51, %v208
  %v210 = vpop.f32.mrb[0].mxu0
  %211 = vmatprep.mubr.f32.mxu0 0.0
  %212 = vmatmul.mubr.f32.gmra.mrb[0].mxu0 %v82
  %v213 = vpop.f32.mrb[0].mxu0
  %v214 = vadd.f32 %v51, %v213
  %v215 = vpop.f32.mrb[0].mxu0
  %216 = vmatprep.mubr.f32.mxu0 0.0
  %217 = vmatmul.mubr.f32.gmra.mrb[0].mxu0 %v85
  %v218 = vpop.f32.mrb[0].mxu0
  %v219 = vadd.f32 %v51, %v218
  %v220 = vpop.f32.mrb[0].mxu0
  %221 = vmatprep.mubr.f32.mxu0 0.0
  %222 = vmatmul.mubr.f32.gmra.mrb[0].mxu0 %v88
  %v223 = vpop.f32.mrb[0].mxu0
  %v224 = vadd.f32 %v51, %v223
  %v225 = vpop.f32.mrb[0].mxu0
  %226 = vmatprep.mubr.f32.mxu0 0.0
  %227 = vmatmul.mubr.f32.gmra.mrb[0].mxu0 %v91
  %v228 = vpop.f32.mrb[0].mxu0
  %v229 = vadd.f32 %v51, %v228
  %v230 = vpop.f32.mrb[0].mxu0
  %231 = vmatprep.mubr.f32.mxu0 0.0
  %232 = vmatmul.mubr.f32.gmra.mrb[0].mxu0 %v94
  %v233 = vpop.f32.mrb[0].mxu0
  %v234 = vadd.f32 %v51, %v233
  %v235 = vpop.f32.mrb[0].mxu0
  %236 = vmatprep.mubr.f32.mxu0 0.0
  %237 = vmatmul.mubr.f32.gmra.mrb[0].mxu0 %v97
  %v238 = vpop.f32.mrb[0].mxu0
  %v239 = vadd.f32 %v51, %v238
  %v240 = vpop.f32.mrb[0].mxu0
  %241 = vmatprep.mubr.f32.mxu0 0.0
  %242 = vmatmul.mubr.f32.gmra.mrb[0].mxu0 %v100
  %v243 = vpop.f32.mrb[0].mxu0
  %v244 = vadd.f32 %v51, %v243
  %v245 = vpop.f32.mrb[0].mxu0
  %246 = vdwg.mxu0
  %v247 = vtanh.pop %v169
  %v248 = vtanh.pop %v174
  %v249 = vtanh.pop %v179
  %v250 = vtanh.pop %v184
  %v251 = vtanh.pop %v189
  %v252 = vtanh.pop %v194
  %v253 = vtanh.pop %v199
  %v254 = vtanh.pop %v204
  %v255 = vtanh.pop %v209
  %v256 = vtanh.pop %v214
  %v257 = vtanh.pop %v219
  %v258 = vtanh.pop %v224
  %v259 = vtanh.pop %v229
  %v260 = vtanh.pop %v234
  %v261 = vtanh.pop %v239
  %v262 = vtanh.pop %v244
  %v263 = vld [vmem:[%s3] sm:$0xff]
  %v264 = vld [vmem:[%s3 + $0x8] sm:$0xff]
  %v265 = vld [vmem:[%s3 + $0x10] sm:$0xff]
  %v266 = vld [vmem:[%s3 + $0x18] sm:$0xff]
  %v267 = vld [vmem:[%s3 + $0x20] sm:$0xff]
  %v268 = vld [vmem:[%s3 + $0x28] sm:$0xff]
  %v269 = vld [vmem:[%s3 + $0x30] sm:$0xff]
  %v270 = vld [vmem:[%s3 + $0x38] sm:$0xff]
  %v271 = vld [vmem:[%s4] sm:$0x1]
  %v273 = vlaneseq
  %v274 = vshrl.u32 %v273, 7
  %v275 = vsub.s32 0, %v274
  %v276 = vrot.slane %v271, %v275
  %vm278 = vcmask 523264
  %v280 = vsel %vm278, %v247, 0
  %v283 = vsel %vm278, %v248, 0
  %v286 = vsel %vm278, %v249, 0
  %v289 = vsel %vm278, %v250, 0
  %v292 = vsel %vm278, %v251, 0
  %v295 = vsel %vm278, %v252, 0
  %v298 = vsel %vm278, %v253, 0
  %v301 = vsel %vm278, %v254, 0
  %v304 = vsel %vm278, %v255, 0
  %v307 = vsel %vm278, %v256, 0
  %v310 = vsel %vm278, %v257, 0
  %v313 = vsel %vm278, %v258, 0
  %v316 = vsel %vm278, %v259, 0
  %v319 = vsel %vm278, %v260, 0
  %v322 = vsel %vm278, %v261, 0
  %v325 = vsel %vm278, %v262, 0
  %327 = vmatprep.subr.mxu0 0.0
  %328 = vmatpush1.msra.mxu0 %v263
  %329 = vmatprep.subr.mxu0 0.0
  %330 = vmatpush1.msra.mxu0 %v264
  %331 = vmatprep.subr.mxu0 0.0
  %332 = vmatpush1.msra.mxu0 %v265
  %333 = vmatprep.subr.mxu0 0.0
  %334 = vmatpush1.msra.mxu0 %v266
  %335 = vmatprep.subr.mxu0 0.0
  %336 = vmatpush1.msra.mxu0 %v267
  %337 = vmatprep.subr.mxu0 0.0
  %338 = vmatpush1.msra.mxu0 %v268
  %339 = vmatprep.subr.mxu0 0.0
  %340 = vmatpush1.msra.mxu0 %v269
  %341 = vmatprep.subr.mxu0 0.0
  %342 = vmatpush1.msra.mxu0 %v270
  %343 = vmatprep.subr.mxu0 0.0
  %344 = vmatpush1.msra.mxu0 0.0
  %345 = vmatprep.subr.mxu0 0.0
  %346 = vmatpush1.msra.mxu0 0.0
  %347 = vmatprep.subr.mxu0 0.0
  %348 = vmatpush1.msra.mxu0 0.0
  %349 = vmatprep.subr.mxu0 0.0
  %350 = vmatpush1.msra.mxu0 0.0
  %351 = vmatprep.subr.mxu0 0.0
  %352 = vmatpush1.msra.mxu0 0.0
  %353 = vmatprep.subr.mxu0 0.0
  %354 = vmatpush1.msra.mxu0 0.0
  %355 = vmatprep.subr.mxu0 0.0
  %356 = vmatpush1.msra.mxu0 0.0
  %357 = vmatprep.subr.mxu0 0.0
  %358 = vmatpush1.msra.mxu0 0.0
  %359 = vmatprep.subr.mxu0 0.0
  %360 = vmatpush1.msra.mxu0 0.0
  %361 = vmatprep.subr.mxu0 0.0
  %362 = vmatpush1.msra.mxu0 0.0
  %363 = vmatprep.subr.mxu0 0.0
  %364 = vmatpush1.msra.mxu0 0.0
  %365 = vmatprep.subr.mxu0 0.0
  %366 = vmatpush1.msra.mxu0 0.0
  %367 = vmatprep.subr.mxu0 0.0
  %368 = vmatpush1.msra.mxu0 0.0
  %369 = vmatprep.subr.mxu0 0.0
  %370 = vmatpush1.msra.mxu0 0.0
  %371 = vmatprep.subr.mxu0 0.0
  %372 = vmatpush1.msra.mxu0 0.0
  %373 = vmatprep.subr.mxu0 0.0
  %374 = vmatpush1.msra.mxu0 0.0
  %375 = vmatprep.subr.mxu0 0.0
  %376 = vmatpush1.msra.mxu0 0.0
  %377 = vmatprep.subr.mxu0 0.0
  %378 = vmatpush1.msra.mxu0 0.0
  %379 = vmatprep.subr.mxu0 0.0
  %380 = vmatpush1.msra.mxu0 0.0
  %381 = vmatprep.subr.mxu0 0.0
  %382 = vmatpush1.msra.mxu0 0.0
  %383 = vmatprep.subr.mxu0 0.0
  %384 = vmatpush1.msra.mxu0 0.0
  %385 = vmatprep.subr.mxu0 0.0
  %386 = vmatpush1.msra.mxu0 0.0
  %387 = vmatprep.subr.mxu0 0.0
  %388 = vmatpush1.msra.mxu0 0.0
  %389 = vmatprep.subr.mxu0 0.0
  %390 = vmatpush1.msra.mxu0 0.0
  %391 = vmatprep.mubr.f32.mxu0 0.0
  %392 = vmatmul.mubr.f32.gmra.mrb[0].mxu0 %v280
  %v393 = vpop.f32.mrb[0].mxu0
  %v394 = vadd.f32 %v276, %v393
  %v395 = vpop.f32.mrb[0].mxu0
  %396 = vmatprep.mubr.f32.mxu0 0.0
  %397 = vmatmul.mubr.f32.gmra.mrb[0].mxu0 %v283
  %v398 = vpop.f32.mrb[0].mxu0
  %v399 = vadd.f32 %v276, %v398
  %v400 = vpop.f32.mrb[0].mxu0
  %401 = vmatprep.mubr.f32.mxu0 0.0
  %402 = vmatmul.mubr.f32.gmra.mrb[0].mxu0 %v286
  %v403 = vpop.f32.mrb[0].mxu0
  %v404 = vadd.f32 %v276, %v403
  %v405 = vpop.f32.mrb[0].mxu0
  %406 = vmatprep.mubr.f32.mxu0 0.0
  %407 = vmatmul.mubr.f32.gmra.mrb[0].mxu0 %v289
  %v408 = vpop.f32.mrb[0].mxu0
  %v409 = vadd.f32 %v276, %v408
  %v410 = vpop.f32.mrb[0].mxu0
  %411 = vmatprep.mubr.f32.mxu0 0.0
  %412 = vmatmul.mubr.f32.gmra.mrb[0].mxu0 %v292
  %v413 = vpop.f32.mrb[0].mxu0
  %v414 = vadd.f32 %v276, %v413
  %v415 = vpop.f32.mrb[0].mxu0
  %416 = vmatprep.mubr.f32.mxu0 0.0
  %417 = vmatmul.mubr.f32.gmra.mrb[0].mxu0 %v295
  %v418 = vpop.f32.mrb[0].mxu0
  %v419 = vadd.f32 %v276, %v418
  %v420 = vpop.f32.mrb[0].mxu0
  %421 = vmatprep.mubr.f32.mxu0 0.0
  %422 = vmatmul.mubr.f32.gmra.mrb[0].mxu0 %v298
  %v423 = vpop.f32.mrb[0].mxu0
  %v424 = vadd.f32 %v276, %v423
  %v425 = vpop.f32.mrb[0].mxu0
  %426 = vmatprep.mubr.f32.mxu0 0.0
  %427 = vmatmul.mubr.f32.gmra.mrb[0].mxu0 %v301
  %v428 = vpop.f32.mrb[0].mxu0
  %v429 = vadd.f32 %v276, %v428
  %v430 = vpop.f32.mrb[0].mxu0
  %431 = vmatprep.mubr.f32.mxu0 0.0
  %432 = vmatmul.mubr.f32.gmra.mrb[0].mxu0 %v304
  %v433 = vpop.f32.mrb[0].mxu0
  %v434 = vadd.f32 %v276, %v433
  %v435 = vpop.f32.mrb[0].mxu0
  %436 = vmatprep.mubr.f32.mxu0 0.0
  %437 = vmatmul.mubr.f32.gmra.mrb[0].mxu0 %v307
  %v438 = vpop.f32.mrb[0].mxu0
  %v439 = vadd.f32 %v276, %v438
  %v440 = vpop.f32.mrb[0].mxu0
  %441 = vmatprep.mubr.f32.mxu0 0.0
  %442 = vmatmul.mubr.f32.gmra.mrb[0].mxu0 %v310
  %v443 = vpop.f32.mrb[0].mxu0
  %v444 = vadd.f32 %v276, %v443
  %v445 = vpop.f32.mrb[0].mxu0
  %446 = vmatprep.mubr.f32.mxu0 0.0
  %447 = vmatmul.mubr.f32.gmra.mrb[0].mxu0 %v313
  %v448 = vpop.f32.mrb[0].mxu0
  %v449 = vadd.f32 %v276, %v448
  %v450 = vpop.f32.mrb[0].mxu0
  %451 = vmatprep.mubr.f32.mxu0 0.0
  %452 = vmatmul.mubr.f32.gmra.mrb[0].mxu0 %v316
  %v453 = vpop.f32.mrb[0].mxu0
  %v454 = vadd.f32 %v276, %v453
  %v455 = vpop.f32.mrb[0].mxu0
  %456 = vmatprep.mubr.f32.mxu0 0.0
  %457 = vmatmul.mubr.f32.gmra.mrb[0].mxu0 %v319
  %v458 = vpop.f32.mrb[0].mxu0
  %v459 = vadd.f32 %v276, %v458
  %v460 = vpop.f32.mrb[0].mxu0
  %461 = vmatprep.mubr.f32.mxu0 0.0
  %462 = vmatmul.mubr.f32.gmra.mrb[0].mxu0 %v322
  %v463 = vpop.f32.mrb[0].mxu0
  %v464 = vadd.f32 %v276, %v463
  %v465 = vpop.f32.mrb[0].mxu0
  %466 = vmatprep.mubr.f32.mxu0 0.0
  %467 = vmatmul.mubr.f32.gmra.mrb[0].mxu0 %v325
  %v468 = vpop.f32.mrb[0].mxu0
  %v469 = vadd.f32 %v276, %v468
  %v470 = vpop.f32.mrb[0].mxu0
  %471 = vdwg.mxu0
  %v472 = vtanh.pop %v394
  %v473 = vtanh.pop %v399
  %v474 = vtanh.pop %v404
  %v475 = vtanh.pop %v409
  %v476 = vtanh.pop %v414
  %v477 = vtanh.pop %v419
  %v478 = vtanh.pop %v424
  %v479 = vtanh.pop %v429
  %v480 = vtanh.pop %v434
  %v481 = vtanh.pop %v439
  %v482 = vtanh.pop %v444
  %v483 = vtanh.pop %v449
  %v484 = vtanh.pop %v454
  %v485 = vtanh.pop %v459
  %v486 = vtanh.pop %v464
  %v487 = vtanh.pop %v469
  %v488 = vld [vmem:[%s5] sm:$0x1]
  %v490 = vlaneseq
  %v491 = vshrl.u32 %v490, 7
  %v492 = vsub.s32 0, %v491
  %v493 = vrot.slane %v488, %v492
  %v495 = vmul.f32 %v472, %v493
  %v496 = vmul.f32 %v473, %v493
  %v497 = vmul.f32 %v474, %v493
  %v498 = vmul.f32 %v475, %v493
  %v499 = vmul.f32 %v476, %v493
  %v500 = vmul.f32 %v477, %v493
  %v501 = vmul.f32 %v478, %v493
  %v502 = vmul.f32 %v479, %v493
  %v503 = vmul.f32 %v480, %v493
  %v504 = vmul.f32 %v481, %v493
  %v505 = vmul.f32 %v482, %v493
  %v506 = vmul.f32 %v483, %v493
  %v507 = vmul.f32 %v484, %v493
  %v508 = vmul.f32 %v485, %v493
  %v509 = vmul.f32 %v486, %v493
  %v510 = vmul.f32 %v487, %v493
  %v511 = vsel %vm278, %v495, 0.0
  %512 = vadd.xlane.f32.xlu0 %v511
  %v513 = vpop.xlane.xlu0 %512
  %v514 = vsel %vm278, %v496, 0.0
  %515 = vadd.xlane.f32.xlu0 %v514
  %v516 = vpop.xlane.xlu0 %515
  %v517 = vsel %vm278, %v497, 0.0
  %518 = vadd.xlane.f32.xlu0 %v517
  %v519 = vpop.xlane.xlu0 %518
  %v520 = vsel %vm278, %v498, 0.0
  %521 = vadd.xlane.f32.xlu0 %v520
  %v522 = vpop.xlane.xlu0 %521
  %v523 = vsel %vm278, %v499, 0.0
  %524 = vadd.xlane.f32.xlu0 %v523
  %v525 = vpop.xlane.xlu0 %524
  %v526 = vsel %vm278, %v500, 0.0
  %527 = vadd.xlane.f32.xlu0 %v526
  %v528 = vpop.xlane.xlu0 %527
  %v529 = vsel %vm278, %v501, 0.0
  %530 = vadd.xlane.f32.xlu0 %v529
  %v531 = vpop.xlane.xlu0 %530
  %v532 = vsel %vm278, %v502, 0.0
  %533 = vadd.xlane.f32.xlu0 %v532
  %v534 = vpop.xlane.xlu0 %533
  %v535 = vsel %vm278, %v503, 0.0
  %536 = vadd.xlane.f32.xlu0 %v535
  %v537 = vpop.xlane.xlu0 %536
  %v538 = vsel %vm278, %v504, 0.0
  %539 = vadd.xlane.f32.xlu0 %v538
  %v540 = vpop.xlane.xlu0 %539
  %v541 = vsel %vm278, %v505, 0.0
  %542 = vadd.xlane.f32.xlu0 %v541
  %v543 = vpop.xlane.xlu0 %542
  %v544 = vsel %vm278, %v506, 0.0
  %545 = vadd.xlane.f32.xlu0 %v544
  %v546 = vpop.xlane.xlu0 %545
  %v547 = vsel %vm278, %v507, 0.0
  %548 = vadd.xlane.f32.xlu0 %v547
  %v549 = vpop.xlane.xlu0 %548
  %v550 = vsel %vm278, %v508, 0.0
  %551 = vadd.xlane.f32.xlu0 %v550
  %v552 = vpop.xlane.xlu0 %551
  %v553 = vsel %vm278, %v509, 0.0
  %554 = vadd.xlane.f32.xlu0 %v553
  %v555 = vpop.xlane.xlu0 %554
  %v556 = vsel %vm278, %v510, 0.0
  %557 = vadd.xlane.f32.xlu0 %v556
  %v558 = vpop.xlane.xlu0 %557
  %v559 = vld [vmem:[#allocation2] sm:$0x1]
  %v561 = vlaneseq
  %v562 = vshrl.u32 %v561, 7
  %v563 = vsub.s32 0, %v562
  %v564 = vrot.slane %v559, %v563
  %v566 = vadd.f32 %v513, %v564
  %v567 = vadd.f32 %v516, %v564
  %v568 = vadd.f32 %v519, %v564
  %v569 = vadd.f32 %v522, %v564
  %v570 = vadd.f32 %v525, %v564
  %v571 = vadd.f32 %v528, %v564
  %v572 = vadd.f32 %v531, %v564
  %v573 = vadd.f32 %v534, %v564
  %v574 = vadd.f32 %v537, %v564
  %v575 = vadd.f32 %v540, %v564
  %v576 = vadd.f32 %v543, %v564
  %v577 = vadd.f32 %v546, %v564
  %v578 = vadd.f32 %v549, %v564
  %v579 = vadd.f32 %v552, %v564
  %v580 = vadd.f32 %v555, %v564
  %v581 = vadd.f32 %v558, %v564
  %v582 = vxor.u32 %v566, 2147483648
  %v583 = vxor.u32 %v567, 2147483648
  %v584 = vxor.u32 %v568, 2147483648
  %v585 = vxor.u32 %v569, 2147483648
  %v586 = vxor.u32 %v570, 2147483648
  %v587 = vxor.u32 %v571, 2147483648
  %v588 = vxor.u32 %v572, 2147483648
  %v589 = vxor.u32 %v573, 2147483648
  %v590 = vxor.u32 %v574, 2147483648
  %v591 = vxor.u32 %v575, 2147483648
  %v592 = vxor.u32 %v576, 2147483648
  %v593 = vxor.u32 %v577, 2147483648
  %v594 = vxor.u32 %v578, 2147483648
  %v595 = vxor.u32 %v579, 2147483648
  %v596 = vxor.u32 %v580, 2147483648
  %v597 = vxor.u32 %v581, 2147483648
  %v598 = vmul.f32 %v582, 1.442695
  %v599 = vpow.pop %v598
  %v600 = vmul.f32 %v583, 1.442695
  %v601 = vpow.pop %v600
  %v602 = vmul.f32 %v584, 1.442695
  %v603 = vpow.pop %v602
  %v604 = vmul.f32 %v585, 1.442695
  %v605 = vpow.pop %v604
  %v606 = vmul.f32 %v586, 1.442695
  %v607 = vpow.pop %v606
  %v608 = vmul.f32 %v587, 1.442695
  %v609 = vpow.pop %v608
  %v610 = vmul.f32 %v588, 1.442695
  %v611 = vpow.pop %v610
  %v612 = vmul.f32 %v589, 1.442695
  %v613 = vpow.pop %v612
  %v614 = vmul.f32 %v590, 1.442695
  %v615 = vpow.pop %v614
  %v616 = vmul.f32 %v591, 1.442695
  %v617 = vpow.pop %v616
  %v618 = vmul.f32 %v592, 1.442695
  %v619 = vpow.pop %v618
  %v620 = vmul.f32 %v593, 1.442695
  %v621 = vpow.pop %v620
  %v622 = vmul.f32 %v594, 1.442695
  %v623 = vpow.pop %v622
  %v624 = vmul.f32 %v595, 1.442695
  %v625 = vpow.pop %v624
  %v626 = vmul.f32 %v596, 1.442695
  %v627 = vpow.pop %v626
  %v628 = vmul.f32 %v597, 1.442695
  %v629 = vpow.pop %v628
  %v630 = vadd.f32 %v599, 1.0
  %v631 = vadd.f32 %v601, 1.0
  %v632 = vadd.f32 %v603, 1.0
  %v633 = vadd.f32 %v605, 1.0
  %v634 = vadd.f32 %v607, 1.0
  %v635 = vadd.f32 %v609, 1.0
  %v636 = vadd.f32 %v611, 1.0
  %v637 = vadd.f32 %v613, 1.0
  %v638 = vadd.f32 %v615, 1.0
  %v639 = vadd.f32 %v617, 1.0
  %v640 = vadd.f32 %v619, 1.0
  %v641 = vadd.f32 %v621, 1.0
  %v642 = vadd.f32 %v623, 1.0
  %v643 = vadd.f32 %v625, 1.0
  %v644 = vadd.f32 %v627, 1.0
  %v645 = vadd.f32 %v629, 1.0
  %v646 = vrcp.pop %v630
  %v647 = vmul.f32 1.0, %v646
  %v648 = vrcp.pop %v631
  %v649 = vmul.f32 1.0, %v648
  %v650 = vrcp.pop %v632
  %v651 = vmul.f32 1.0, %v650
  %v652 = vrcp.pop %v633
  %v653 = vmul.f32 1.0, %v652
  %v654 = vrcp.pop %v634
  %v655 = vmul.f32 1.0, %v654
  %v656 = vrcp.pop %v635
  %v657 = vmul.f32 1.0, %v656
  %v658 = vrcp.pop %v636
  %v659 = vmul.f32 1.0, %v658
  %v660 = vrcp.pop %v637
  %v661 = vmul.f32 1.0, %v660
  %v662 = vrcp.pop %v638
  %v663 = vmul.f32 1.0, %v662
  %v664 = vrcp.pop %v639
  %v665 = vmul.f32 1.0, %v664
  %v666 = vrcp.pop %v640
  %v667 = vmul.f32 1.0, %v666
  %v668 = vrcp.pop %v641
  %v669 = vmul.f32 1.0, %v668
  %v670 = vrcp.pop %v642
  %v671 = vmul.f32 1.0, %v670
  %v672 = vrcp.pop %v643
  %v673 = vmul.f32 1.0, %v672
  %v674 = vrcp.pop %v644
  %v675 = vmul.f32 1.0, %v674
  %v676 = vrcp.pop %v645
  %v677 = vmul.f32 1.0, %v676
  %vm678 = vcmask 7168
  %679 = vst.msk [vmem:[%s7] sm:$0xff] %vm678, %v647
  %680 = vst.msk [vmem:[%s7 + $0x8] sm:$0xff] %vm678, %v649
  %681 = vst.msk [vmem:[%s7 + $0x10] sm:$0xff] %vm678, %v651
  %682 = vst.msk [vmem:[%s7 + $0x18] sm:$0xff] %vm678, %v653
  %683 = vst.msk [vmem:[%s7 + $0x20] sm:$0xff] %vm678, %v655
  %684 = vst.msk [vmem:[%s7 + $0x28] sm:$0xff] %vm678, %v657
  %685 = vst.msk [vmem:[%s7 + $0x30] sm:$0xff] %vm678, %v659
  %686 = vst.msk [vmem:[%s7 + $0x38] sm:$0xff] %vm678, %v661
  %687 = vst.msk [vmem:[%s7 + $0x40] sm:$0xff] %vm678, %v663
  %688 = vst.msk [vmem:[%s7 + $0x48] sm:$0xff] %vm678, %v665
  %689 = vst.msk [vmem:[%s7 + $0x50] sm:$0xff] %vm678, %v667
  %690 = vst.msk [vmem:[%s7 + $0x58] sm:$0xff] %vm678, %v669
  %691 = vst.msk [vmem:[%s7 + $0x60] sm:$0xff] %vm678, %v671
  %692 = vst.msk [vmem:[%s7 + $0x68] sm:$0xff] %vm678, %v673
  %693 = vst.msk [vmem:[%s7 + $0x70] sm:$0xff] %vm678, %v675
  %694 = vst.msk [vmem:[%s7 + $0x78] sm:$0xff] %vm678, %v677
  // Predicated region
  $region30: #{tpu_custom_call.1} parent=0 // pred_check
    _
  $region31: #{tpu_custom_call.1} parent=0 // pred_check_branch
    %696 = sbr.rel (0) target = $region33
  $region32: #{tpu_custom_call.1} parent=0 // pred_region
    _
  $region33: #{tpu_custom_call.1} parent=0 // pred_fallthru
    _
  // Predicated region
  $region34: #{tpu_custom_call.1} parent=0 // pred_check
    _
  $region35: #{tpu_custom_call.1} parent=0 // pred_check_branch
    %698 = sbr.rel (0) target = $region37
  $region36: #{tpu_custom_call.1} parent=0 // pred_region
    _
  $region37: #{tpu_custom_call.1} parent=0 // pred_fallthru
    _

</llo_original>
